<compile_context>
chip_gen: v7x
topology: tpu7x:2x2x1
jax: 0.10.0
libtpu: 0.0.40
codegen_flags: <defaults>
</compile_context>

<pallas_src>
import numpy as np

import jax
import jax.numpy as jnp
from jax import lax
from jax.experimental import pallas as pl
from jax.experimental.pallas import tpu as pltpu


def _pick_tb(N, C_in, C_out, max_rows=256):
    """Largest divisor TB of N giving legal (TB*C) sublane block dims.

    max_rows ~ MXU height target (256 for v6e/v7x; 128 would also be fine on v5e —
    at demo sizes TB == N anyway)."""
    divisors = [d for d in range(N, 0, -1) if N % d == 0]

    def legal(tb):
        in_ok = (tb * C_in) % 8 == 0 or tb == N      # (8,128) block rule
        out_ok = (tb * C_out) % 8 == 0 or tb == N
        return in_ok and out_ok

    for tb in divisors:
        if tb * C_out <= max_rows and legal(tb):
            return tb
    for tb in divisors:
        if legal(tb):
            return tb
    return N


def _make_kernel(mode, has_pre, need_sel, W, HW):
    # Positive circular-roll shifts (mod HW) that bring the value at p-1, p+1, p-W, p+W
    # to position p (pltpu.roll == jnp.roll semantics: out[i] = x[i - shift]).
    sL, sR = 1 % HW, (HW - 1) % HW
    sU, sD = W % HW, (HW - W) % HW

    def kernel(*refs):
        it = iter(refs)
        x_ref = next(it)
        w_ref = next(it) if has_pre else None
        b_ref = next(it) if has_pre else None
        m_ref = next(it)                              # (4, HW) f32 0/1 tap-validity masks
        sel_ref = next(it) if need_sel else None
        inv_ref = next(it) if mode == "avg" else None
        o_ref = next(it)

        x = x_ref[...]                                # (TB*C_in, HW), lane-dense
        if has_pre:
            # ReLU -> 1x1 conv (BN scale folded into the block-diag weight) on the MXU.
            y = jnp.dot(w_ref[...], jnp.maximum(x, 0.0),
                        preferred_element_type=jnp.float32) + b_ref[...]
        else:
            y = x

        mL = m_ref[0:1, :]
        mR = m_ref[1:2, :]
        mU = m_ref[2:3, :]
        mD = m_ref[3:4, :]

        # ---- 3x3 pool, separable; neighbours via in-register XLU rolls + masks ----
        yl = pltpu.roll(y, sL, 1)                     # value at p-1
        yr = pltpu.roll(y, sR, 1)                     # value at p+1
        if mode == "max":
            hp = jnp.maximum(y, jnp.maximum(jnp.where(mL > 0, yl, -jnp.inf),
                                            jnp.where(mR > 0, yr, -jnp.inf)))
        else:
            hp = y + yl * mL + yr * mR

        hu = pltpu.roll(hp, sU, 1)                    # value at p-W
        hd = pltpu.roll(hp, sD, 1)                    # value at p+W
        if mode == "max":
            vp = jnp.maximum(hp, jnp.maximum(jnp.where(mU > 0, hu, -jnp.inf),
                                             jnp.where(mD > 0, hd, -jnp.inf)))
        else:
            vp = hp + hu * mU + hd * mD

        if need_sel:                                  # stride>1: one-hot centre pick on MXU
            vp = jnp.dot(vp, sel_ref[...].astype(jnp.float32),
                         preferred_element_type=jnp.float32)
        if mode == "avg":                             # count_include_pad=False divisors
            vp = vp * inv_ref[...]
        o_ref[...] = vp.astype(o_ref.dtype)

    return kernel


def pooling_forward(x_nchw, mode, stride, preprocess_params=None):
    """POOLING forward: optional ReLU+Conv1x1+BN(eval) preprocess, then 3x3 pool."""
    assert mode in ("avg", "max")
    N, C_in, H, W = map(int, x_nchw.shape)
    s = int(stride)
    Hout = (H + 2 - 3) // s + 1
    Wout = (W + 2 - 3) // s + 1
    HW, HWo = H * W, Hout * Wout
    has_pre = preprocess_params is not None
    C_out = int(preprocess_params[0].shape[1]) if has_pre else C_in
    need_sel = s > 1
    OutN = HW if not need_sel else max(128, ((HWo + 127) // 128) * 128)  # lane-dense out

    TB = _pick_tb(N, C_in, C_out)
    G = N // TB

    args = [x_nchw.reshape(N * C_in, HW)]                       # contiguous => free reshape
    in_specs = [pl.BlockSpec((TB * C_in, HW), lambda g: (g, 0))]

    if has_pre:
        w, bn_scale, bn_bias = preprocess_params                # w: (C_in, C_out)
        wf = (w * bn_scale[None, :]).T.astype(jnp.float32)      # (C_out, C_in), BN folded
        wb = jnp.kron(jnp.eye(TB, dtype=jnp.float32), wf)       # block-diag for TB samples
        bias = jnp.tile(bn_bias.reshape(C_out, 1).astype(jnp.float32), (TB, 1))
        args += [wb, bias]
        in_specs += [pl.BlockSpec((TB * C_out, TB * C_in), lambda g: (0, 0)),
                     pl.BlockSpec((TB * C_out, 1), lambda g: (0, 0))]
    # TODO(synk): BatchNorm is folded in eval mode (running stats); training-mode batch
    # statistics are not computed.

    # Host-precomputed 3x3 tap validity (left, right, up, down) for the flattened HW axis.
    col = np.arange(HW) % W
    row = np.arange(HW) // W
    masks = np.stack([col >= 1, col <= W - 2, row >= 1, row <= H - 2]).astype(np.float32)
    args.append(jnp.asarray(masks))
    in_specs.append(pl.BlockSpec((4, HW), lambda g: (0, 0)))

    if need_sel:
        q = np.arange(HWo)
        sel = np.zeros((HW, OutN), np.float32)
        sel[(q // Wout) * s * W + (q % Wout) * s, q] = 1.0
        args.append(jnp.asarray(sel, dtype=jnp.bfloat16))        # one-hot: exact in bf16
        in_specs.append(pl.BlockSpec((HW, OutN), lambda g: (0, 0)))

    if mode == "avg":
        ho = np.arange(Hout)[:, None] * s
        wo = np.arange(Wout)[None, :] * s
        cnt = ((np.minimum(ho + 2, H) - np.maximum(ho - 1, 0)) *
               (np.minimum(wo + 2, W) - np.maximum(wo - 1, 0))).astype(np.float32)
        inv = np.ones((1, OutN), np.float32)
        inv[0, :HWo] = 1.0 / cnt.reshape(HWo)                    # f32: keeps 1e-5 tolerance
        args.append(jnp.asarray(inv))
        in_specs.append(pl.BlockSpec((1, OutN), lambda g: (0, 0)))

    flops = 6 * N * C_out * HW                                   # pool adds / maxes
    if has_pre:
        flops += 2 * N * (TB * C_in) * C_out * HW                # block-diag conv matmul
    if need_sel:
        flops += 2 * N * C_out * HW * OutN                       # sel matmul
    bytes_accessed = int(N * C_out * OutN * 4 +
                         sum(int(np.prod(a.shape)) * a.dtype.itemsize for a in args))

    out = pl.pallas_call(
        _make_kernel(mode, has_pre, need_sel, W, HW),
        out_shape=jax.ShapeDtypeStruct((N * C_out, OutN), jnp.float32),
        grid=(G,),
        in_specs=in_specs,
        out_specs=pl.BlockSpec((TB * C_out, OutN), lambda g: (g, 0)),
        compiler_params=pltpu.CompilerParams(dimension_semantics=("parallel",)),
        cost_estimate=pl.CostEstimate(flops=flops, transcendentals=0,
                                      bytes_accessed=bytes_accessed),
    )(*args)

    if need_sel and OutN != HWo:
        out = out[:, :HWo]                                       # drop lane padding
    return out.reshape(N, C_out, Hout, Wout)


# ------------------------------ pure-JAX reference -----------------------------
def ref_forward(x_nchw, mode, stride, preprocess_params=None):
    x = x_nchw
    if preprocess_params is not None:
        w, scale, bias = preprocess_params
        y = jnp.einsum("nihw,io->nohw", jnp.maximum(x, 0.0), w)
        x = y * scale[None, :, None, None] + bias[None, :, None, None]
    window, strides = (1, 1, 3, 3), (1, 1, stride, stride)
    pad = [(0, 0), (0, 0), (1, 1), (1, 1)]
    if mode == "max":
        return lax.reduce_window(x, -jnp.inf, lax.max, window, strides, pad)
    ssum = lax.reduce_window(x, 0.0, lax.add, window, strides, pad)
    cnt = lax.reduce_window(jnp.ones_like(x), 0.0, lax.add, window, strides, pad)
    return ssum / cnt


if __name__ == "__main__":
    key = jax.random.PRNGKey(0)
    k_x, k_w, k_g, k_b, k_m, k_v, k_x2 = jax.random.split(key, 7)

    N, C_in, C_out, H, W = 2, 4, 8, 16, 16
    x = jax.random.normal(k_x, (N, C_in, H, W), jnp.float32)

    # Synthetic ReLUConvBN(1x1) params (C_in != C_out preprocess path).
    # Conv2d weight (C_out, C_in, 1, 1) stored as a (C_in, C_out) matmul weight.
    conv_w = jax.random.normal(k_w, (C_in, C_out), jnp.float32) * 0.3
    gamma = 0.5 + jax.random.uniform(k_g, (C_out,), jnp.float32)
    beta = 0.1 * jax.random.normal(k_b, (C_out,), jnp.float32)
    run_mean = 0.1 * jax.random.normal(k_m, (C_out,), jnp.float32)
    run_var = 0.5 + jax.random.uniform(k_v, (C_out,), jnp.float32)
    eps = 1e-5
    bn_scale = gamma / jnp.sqrt(run_var + eps)
    bn_bias = beta - run_mean * bn_scale
    params = (conv_w, bn_scale, bn_bias)

    # C_in == C_out path (no preprocess).
    x_same = jax.random.normal(k_x2, (N, C_out, H, W), jnp.float32)

    for mode, stride in (("avg", 2), ("max", 2), ("avg", 1), ("max", 1)):
        out = pooling_forward(x, mode, stride, params)
        jax.block_until_ready(out)
        ref = ref_forward(x, mode, stride, params)
        assert out.shape == ref.shape, (mode, stride, out.shape, ref.shape)
        assert jnp.allclose(out, ref, atol=1e-5, rtol=1e-5), (
            mode, stride, float(jnp.max(jnp.abs(out - ref))))

        out2 = pooling_forward(x_same, mode, stride, None)
        jax.block_until_ready(out2)
        ref2 = ref_forward(x_same, mode, stride, None)
        assert out2.shape == ref2.shape, (mode, stride, out2.shape, ref2.shape)
        assert jnp.allclose(out2, ref2, atol=1e-5, rtol=1e-5), (
            mode, stride, float(jnp.max(jnp.abs(out2 - ref2))))

    print("KERNEL_OK")
</pallas_src>

<mosaic_0001>
module attributes {stable_mosaic.version = 11 : i64} {
  func.func @kernel(%arg0: i32, %arg1: memref<8x256xf32, #tpu.memory_space<vmem>>, %arg2: memref<16x8xf32, #tpu.memory_space<vmem>>, %arg3: memref<16x1xf32, #tpu.memory_space<vmem>>, %arg4: memref<4x256xf32, #tpu.memory_space<vmem>>, %arg5: memref<256x128xbf16, #tpu.memory_space<vmem>>, %arg6: memref<1x128xf32, #tpu.memory_space<vmem>>, %arg7: memref<16x128xf32, #tpu.memory_space<vmem>>) attributes {dimension_semantics = [#tpu.dimension_semantics<parallel>], iteration_bounds = array<i64: 1>, scalar_prefetch = 0 : i64, scratch_operands = 0 : i64, tpu.core_type = #tpu.core_type<tc>, window_params = [{transform_indices = @transform_0, window_bounds = array<i64: 8, 256>}, {pipeline_mode = #tpu.pipeline_mode<synchronous>, transform_indices = @transform_1, window_bounds = array<i64: 16, 8>}, {pipeline_mode = #tpu.pipeline_mode<synchronous>, transform_indices = @transform_2, window_bounds = array<i64: 16, 1>}, {pipeline_mode = #tpu.pipeline_mode<synchronous>, transform_indices = @transform_3, window_bounds = array<i64: 4, 256>}, {pipeline_mode = #tpu.pipeline_mode<synchronous>, transform_indices = @transform_4, window_bounds = array<i64: 256, 128>}, {pipeline_mode = #tpu.pipeline_mode<synchronous>, transform_indices = @transform_5, window_bounds = array<i64: 1, 128>}, {transform_indices = @transform_6, window_bounds = array<i64: 16, 128>}]} {
    %c0 = arith.constant 0 : index
    %c0_0 = arith.constant 0 : index
    %0 = vector.load %arg1[%c0, %c0_0] : memref<8x256xf32, #tpu.memory_space<vmem>>, vector<8x256xf32>
    %c0_1 = arith.constant 0 : index
    %c0_2 = arith.constant 0 : index
    %1 = vector.load %arg2[%c0_1, %c0_2] : memref<16x8xf32, #tpu.memory_space<vmem>>, vector<16x8xf32>
    %cst = arith.constant 0.000000e+00 : f32
    %2 = vector.broadcast %cst : f32 to vector<8x256xf32>
    %3 = arith.maximumf %0, %2 : vector<8x256xf32>
    %cst_3 = arith.constant dense<0.000000e+00> : vector<16x256xf32>
    %4 = tpu.matmul %1, %3, %cst_3 {dimension_numbers = #tpu.dot_dimension_numbers<[1], [0], [0], [1], [0, 0, 1, 1], [], []>} : vector<16x8xf32>, vector<8x256xf32>, vector<16x256xf32> -> vector<16x256xf32>
    %c0_4 = arith.constant 0 : index
    %c0_5 = arith.constant 0 : index
    %5 = vector.load %arg3[%c0_4, %c0_5] : memref<16x1xf32, #tpu.memory_space<vmem>>, vector<16x1xf32>
    %6 = vector.broadcast %5 : vector<16x1xf32> to vector<16x256xf32>
    %7 = arith.addf %4, %6 : vector<16x256xf32>
    %c0_6 = arith.constant 0 : index
    %c0_7 = arith.constant 0 : index
    %8 = vector.load %arg4[%c0_6, %c0_7] : memref<4x256xf32, #tpu.memory_space<vmem>>, vector<1x256xf32>
    %c1 = arith.constant 1 : index
    %c0_8 = arith.constant 0 : index
    %9 = vector.load %arg4[%c1, %c0_8] : memref<4x256xf32, #tpu.memory_space<vmem>>, vector<1x256xf32>
    %c2 = arith.constant 2 : index
    %c0_9 = arith.constant 0 : index
    %10 = vector.load %arg4[%c2, %c0_9] : memref<4x256xf32, #tpu.memory_space<vmem>>, vector<1x256xf32>
    %c3 = arith.constant 3 : index
    %c0_10 = arith.constant 0 : index
    %11 = vector.load %arg4[%c3, %c0_10] : memref<4x256xf32, #tpu.memory_space<vmem>>, vector<1x256xf32>
    %c1_i32 = arith.constant 1 : i32
    %12 = tpu.dynamic_rotate %7 by %c1_i32 dim 1 : vector<16x256xf32>, i32 -> vector<16x256xf32>
    %c255_i32 = arith.constant 255 : i32
    %13 = tpu.dynamic_rotate %7 by %c255_i32 dim 1 : vector<16x256xf32>, i32 -> vector<16x256xf32>
    %14 = vector.broadcast %8 : vector<1x256xf32> to vector<16x256xf32>
    %15 = arith.mulf %12, %14 : vector<16x256xf32>
    %16 = arith.addf %7, %15 : vector<16x256xf32>
    %17 = vector.broadcast %9 : vector<1x256xf32> to vector<16x256xf32>
    %18 = arith.mulf %13, %17 : vector<16x256xf32>
    %19 = arith.addf %16, %18 : vector<16x256xf32>
    %c16_i32 = arith.constant 16 : i32
    %20 = tpu.dynamic_rotate %19 by %c16_i32 dim 1 : vector<16x256xf32>, i32 -> vector<16x256xf32>
    %c240_i32 = arith.constant 240 : i32
    %21 = tpu.dynamic_rotate %19 by %c240_i32 dim 1 : vector<16x256xf32>, i32 -> vector<16x256xf32>
    %22 = vector.broadcast %10 : vector<1x256xf32> to vector<16x256xf32>
    %23 = arith.mulf %20, %22 : vector<16x256xf32>
    %24 = arith.addf %19, %23 : vector<16x256xf32>
    %25 = vector.broadcast %11 : vector<1x256xf32> to vector<16x256xf32>
    %26 = arith.mulf %21, %25 : vector<16x256xf32>
    %27 = arith.addf %24, %26 : vector<16x256xf32>
    %c0_11 = arith.constant 0 : index
    %c0_12 = arith.constant 0 : index
    %28 = vector.load %arg5[%c0_11, %c0_12] : memref<256x128xbf16, #tpu.memory_space<vmem>>, vector<256x128xbf16>
    %29 = arith.extf %28 : vector<256x128xbf16> to vector<256x128xf32>
    %cst_13 = arith.constant dense<0.000000e+00> : vector<16x128xf32>
    %30 = tpu.matmul %27, %29, %cst_13 {dimension_numbers = #tpu.dot_dimension_numbers<[1], [0], [0], [1], [0, 0, 1, 1], [], []>} : vector<16x256xf32>, vector<256x128xf32>, vector<16x128xf32> -> vector<16x128xf32>
    %c0_14 = arith.constant 0 : index
    %c0_15 = arith.constant 0 : index
    %31 = vector.load %arg6[%c0_14, %c0_15] : memref<1x128xf32, #tpu.memory_space<vmem>>, vector<1x128xf32>
    %32 = vector.broadcast %31 : vector<1x128xf32> to vector<16x128xf32>
    %33 = arith.mulf %30, %32 : vector<16x128xf32>
    %c0_16 = arith.constant 0 : index
    %c0_17 = arith.constant 0 : index
    %34 = vector.load %arg7[%c0_16, %c0_17] : memref<16x128xf32, #tpu.memory_space<vmem>>, vector<16x128xf32>
    tpu.vector_store %arg7[%c0_16, %c0_17], %33 {strides = array<i32>} : memref<16x128xf32, #tpu.memory_space<vmem>>, vector<16x128xf32>,
    return
  }
  func.func @transform_0(%arg0: i32) -> (i32, i32) {
    %c0_i32 = arith.constant 0 : i32
    %c0_i32_0 = arith.constant 0 : i32
    return %arg0, %c0_i32 : i32, i32
  }
  func.func @transform_1(%arg0: i32) -> (i32, i32) {
    %c0_i32 = arith.constant 0 : i32
    %c0_i32_0 = arith.constant 0 : i32
    %c0_i32_1 = arith.constant 0 : i32
    return %c0_i32, %c0_i32_0 : i32, i32
  }
  func.func @transform_2(%arg0: i32) -> (i32, i32) {
    %c0_i32 = arith.constant 0 : i32
    %c0_i32_0 = arith.constant 0 : i32
    %c0_i32_1 = arith.constant 0 : i32
    return %c0_i32, %c0_i32_0 : i32, i32
  }
  func.func @transform_3(%arg0: i32) -> (i32, i32) {
    %c0_i32 = arith.constant 0 : i32
    %c0_i32_0 = arith.constant 0 : i32
    %c0_i32_1 = arith.constant 0 : i32
    return %c0_i32, %c0_i32_0 : i32, i32
  }
  func.func @transform_4(%arg0: i32) -> (i32, i32) {
    %c0_i32 = arith.constant 0 : i32
    %c0_i32_0 = arith.constant 0 : i32
    %c0_i32_1 = arith.constant 0 : i32
    return %c0_i32, %c0_i32_0 : i32, i32
  }
  func.func @transform_5(%arg0: i32) -> (i32, i32) {
    %c0_i32 = arith.constant 0 : i32
    %c0_i32_0 = arith.constant 0 : i32
    %c0_i32_1 = arith.constant 0 : i32
    return %c0_i32, %c0_i32_0 : i32, i32
  }
  func.func @transform_6(%arg0: i32) -> (i32, i32) {
    %c0_i32 = arith.constant 0 : i32
    %c0_i32_0 = arith.constant 0 : i32
    return %arg0, %c0_i32 : i32, i32
  }
}

</mosaic_0001>

<llo_original>
// kernel: tpu_custom_call.1
$region0: #{tpu_custom_call.1}
  #allocation0 [shape = 'u32[]', space=smem, size = 0x4, offset = 0x4, fixed_abs, tag = 'smem constant byte address 0x4 - core index']
  #allocation1 [shape = 'u32[144,128]{1,0:T(1,128)}', space=vmem, size = 0x12000, scoped, tag = 'internal scratch']
  %s0 = inlined_call_operand.vmem [shape: f32[8,256], index: 0, kind: input, shape index: {}]
  %s1 = inlined_call_operand.vmem [shape: f32[16,8], index: 1, kind: input, shape index: {}]
  %s2 = inlined_call_operand.vmem [shape: f32[16,1], index: 2, kind: input, shape index: {}]
  %s3 = inlined_call_operand.vmem [shape: f32[4,256], index: 3, kind: input, shape index: {}]
  %s4 = inlined_call_operand.hbm [shape: bf16[256,128], index: 4, kind: input, shape index: {}]
  %s5 = inlined_call_operand.vmem [shape: f32[1,128], index: 5, kind: input, shape index: {}]
  %s6 = inlined_call_operand.hbm [shape: f32[16,128], index: 6, kind: output, shape index: {}]
  %s7 = sld [smem:[#allocation0]]
  $region38: #{tpu_custom_call.1} parent=0
    _
  %s9 = ssub.s32 1, %s7
  %s10 = scalar_select 0, %s9, %s7
  $region1: #{tpu_custom_call.1} parent=0
    #allocation2 [shape = 'u8[65536]{0}', space=vmem, size = 0x10000, scoped, tag = 'input window, operand 4, single buffered']
    #allocation3 [shape = 's32[1]{0}', space=sflag, size = 0x4, scoped, tag = 'scoped memory for tpu_custom_call.1']
    #allocation4 [shape = 's32[1]{0}', space=sflag, size = 0x4, scoped, tag = 'scoped memory for tpu_custom_call.1']
    #allocation5 [shape = 'u8[8192]{0}', space=vmem, size = 0x2000, scoped, tag = 'output window, operand 0, single buffered']
    %11 = vsyncpa [#allocation3], 0
    %12 = vsyncpa [#allocation4], 0
    // Predicated region
    $region2: #{tpu_custom_call.1} parent=1 // pred_check
      _
    $region3: #{tpu_custom_call.1} parent=1 // pred_check_branch
      %14 = sbr.rel (0) target = $region5
    $region4: #{tpu_custom_call.1} parent=1 // pred_region
      _
    $region5: #{tpu_custom_call.1} parent=1 // pred_fallthru
      _
    // Predicated region
    $region6: #{tpu_custom_call.1} parent=1 // pred_check
      _
    $region7: #{tpu_custom_call.1} parent=1 // pred_check_branch
      %16 = sbr.rel (0) target = $region9
    $region8: #{tpu_custom_call.1} parent=1 // pred_region
      _
    $region9: #{tpu_custom_call.1} parent=1 // pred_fallthru
      _
    // Predicated region
    $region10: #{tpu_custom_call.1} parent=1 // pred_check
      _
    $region11: #{tpu_custom_call.1} parent=1 // pred_check_branch
      %18 = sbr.rel (0) target = $region13
    $region12: #{tpu_custom_call.1} parent=1 // pred_region
      _
    $region13: #{tpu_custom_call.1} parent=1 // pred_fallthru
      _
    // Predicated region
    $region14: #{tpu_custom_call.1} parent=1 // pred_check
      _
    $region15: #{tpu_custom_call.1} parent=1 // pred_check_branch
      %20 = sbr.rel (0) target = $region17
    $region16: #{tpu_custom_call.1} parent=1 // pred_region
      _
    $region17: #{tpu_custom_call.1} parent=1 // pred_fallthru
      _
    // Predicated region
    $region18: #{tpu_custom_call.1} parent=1 // pred_check
      _
    $region19: #{tpu_custom_call.1} parent=1 // pred_check_branch
      %22 = sbr.rel (0) target = $region21
    $region20: #{tpu_custom_call.1} parent=1 // pred_region
      %s24 = ssub.s32 2048, 2048
      %25 = vsyncadd [#allocation3], %s24
      %s26 = sshll.u32 [#allocation2], 4
      %s27 = int_to_ptr.vmem [resolvable:$true] %s26
      %32 = dma.hbm_to_vmem [thread:$0]  %s4, 2048, %s27, [#allocation3], 64, 64, 4
    $region21: #{tpu_custom_call.1} parent=1 // pred_fallthru
      _
    // Predicated region
    $region22: #{tpu_custom_call.1} parent=1 // pred_check
      _
    $region23: #{tpu_custom_call.1} parent=1 // pred_check_branch
      %34 = sbr.rel (0) target = $region25
    $region24: #{tpu_custom_call.1} parent=1 // pred_region
      _
    $region25: #{tpu_custom_call.1} parent=1 // pred_fallthru
      _
    // Predicated region
    $region26: #{tpu_custom_call.1} parent=1 // pred_check
      _
    $region27: #{tpu_custom_call.1} parent=1 // pred_check_branch
      %36 = sbr.rel (0) target = $region29
    $region28: #{tpu_custom_call.1} parent=1 // pred_region
      %37 = dma.done [#allocation3], 2048
    $region29: #{tpu_custom_call.1} parent=1 // pred_fallthru
      _
    %v38 = vld [vmem:[%s0] sm:$0xff]
    %v39 = vld [vmem:[%s0 + $0x8] sm:$0xff]
    %v40 = vld [vmem:[%s1] sm:$0xff]
    %v41 = vld [vmem:[%s1 + $0x8] sm:$0xff]
    %v42 = vmax.f32 %v38, 0.0
    %v43 = vmax.f32 %v39, 0.0
    %v44 = vld [vmem:[%s2] sm:$0xff]
    %v45 = vld [vmem:[%s2 + $0x8] sm:$0xff]
    %47 = vset.pattern.permute.xlu0 0
    %48 = vperm.xlu0 %47, %v44
    %v49 = vpop.permute.xlu0 %48
    %52 = vset.pattern.permute.xlu0 0
    %53 = vperm.xlu0 %52, %v45
    %v54 = vpop.permute.xlu0 %53
    %vm56 = vcmask 64512
    %v58 = vsel %vm56, %v40, 0
    %v61 = vsel %vm56, %v41, 0
    %63 = vmatprep.subr.mxu0 %v43
    %64 = vmatpush1.msra.mxu0 %v42
    %65 = vmatprep.subr.mxu0 0.0
    %66 = vmatpush1.msra.mxu0 0.0
    %67 = vmatprep.subr.mxu0 0.0
    %68 = vmatpush1.msra.mxu0 0.0
    %69 = vmatprep.subr.mxu0 0.0
    %70 = vmatpush1.msra.mxu0 0.0
    %71 = vmatprep.subr.mxu0 0.0
    %72 = vmatpush1.msra.mxu0 0.0
    %73 = vmatprep.subr.mxu0 0.0
    %74 = vmatpush1.msra.mxu0 0.0
    %75 = vmatprep.subr.mxu0 0.0
    %76 = vmatpush1.msra.mxu0 0.0
    %77 = vmatprep.subr.mxu0 0.0
    %78 = vmatpush1.msra.mxu0 0.0
    %79 = vmatprep.subr.mxu0 0.0
    %80 = vmatpush1.msra.mxu0 0.0
    %81 = vmatprep.subr.mxu0 0.0
    %82 = vmatpush1.msra.mxu0 0.0
    %83 = vmatprep.subr.mxu0 0.0
    %84 = vmatpush1.msra.mxu0 0.0
    %85 = vmatprep.subr.mxu0 0.0
    %86 = vmatpush1.msra.mxu0 0.0
    %87 = vmatprep.subr.mxu0 0.0
    %88 = vmatpush1.msra.mxu0 0.0
    %89 = vmatprep.subr.mxu0 0.0
    %90 = vmatpush1.msra.mxu0 0.0
    %91 = vmatprep.subr.mxu0 0.0
    %92 = vmatpush1.msra.mxu0 0.0
    %93 = vmatprep.subr.mxu0 0.0
    %94 = vmatpush1.msra.mxu0 0.0
    %95 = vmatprep.subr.mxu0 0.0
    %96 = vmatpush1.msra.mxu0 0.0
    %97 = vmatprep.subr.mxu0 0.0
    %98 = vmatpush1.msra.mxu0 0.0
    %99 = vmatprep.subr.mxu0 0.0
    %100 = vmatpush1.msra.mxu0 0.0
    %101 = vmatprep.subr.mxu0 0.0
    %102 = vmatpush1.msra.mxu0 0.0
    %103 = vmatprep.subr.mxu0 0.0
    %104 = vmatpush1.msra.mxu0 0.0
    %105 = vmatprep.subr.mxu0 0.0
    %106 = vmatpush1.msra.mxu0 0.0
    %107 = vmatprep.subr.mxu0 0.0
    %108 = vmatpush1.msra.mxu0 0.0
    %109 = vmatprep.subr.mxu0 0.0
    %110 = vmatpush1.msra.mxu0 0.0
    %111 = vmatprep.subr.mxu0 0.0
    %112 = vmatpush1.msra.mxu0 0.0
    %113 = vmatprep.subr.mxu0 0.0
    %114 = vmatpush1.msra.mxu0 0.0
    %115 = vmatprep.subr.mxu0 0.0
    %116 = vmatpush1.msra.mxu0 0.0
    %117 = vmatprep.subr.mxu0 0.0
    %118 = vmatpush1.msra.mxu0 0.0
    %119 = vmatprep.subr.mxu0 0.0
    %120 = vmatpush1.msra.mxu0 0.0
    %121 = vmatprep.subr.mxu0 0.0
    %122 = vmatpush1.msra.mxu0 0.0
    %123 = vmatprep.subr.mxu0 0.0
    %124 = vmatpush1.msra.mxu0 0.0
    %125 = vmatprep.subr.mxu0 0.0
    %126 = vmatpush1.msra.mxu0 0.0
    %127 = vmatprep.mubr.f32.mxu0 0.0
    %128 = vmatmul.mubr.f32.gmra.mrb[0].mxu0 %v58
    %v129 = vpop.f32.mrb[0].mxu0
    %v130 = vadd.f32 %v49, %v129
    %v131 = vpop.f32.mrb[0].mxu0
    %v132 = vadd.f32 %v49, %v131
    %133 = vmatprep.mubr.f32.mxu0 0.0
    %134 = vmatmul.mubr.f32.gmra.mrb[0].mxu0 %v61
    %v135 = vpop.f32.mrb[0].mxu0
    %v136 = vadd.f32 %v54, %v135
    %v137 = vpop.f32.mrb[0].mxu0
    %v138 = vadd.f32 %v54, %v137
    %139 = vdwg.mxu0
    %v140 = vld [vmem:[%s3] ss:$4 sm:$0x3]
    %s141 = scalar_lea.vmem %s3, 1
    %v142 = vld [vmem:[%s141] ss:$4 sm:$0x3]
    %s143 = scalar_lea.vmem %s3, 2
    %v144 = vld [vmem:[%s143] ss:$4 sm:$0x3]
    %s145 = scalar_lea.vmem %s3, 3
    %v146 = vld [vmem:[%s145] ss:$4 sm:$0x3]
    %147 = vrot.lane.b32.xlu0 %v130, 1
    %v148 = vpop.permute.xlu0 %147
    %149 = vrot.lane.b32.xlu0 %v136, 1
    %v150 = vpop.permute.xlu0 %149
    %151 = vrot.lane.b32.xlu0 %v132, 1
    %v152 = vpop.permute.xlu0 %151
    %153 = vrot.lane.b32.xlu0 %v138, 1
    %v154 = vpop.permute.xlu0 %153
    %v155 = vlaneseq
    %v156 = vand.u32 %v155, 127
    %vm157 = vcmp.lt.s32.totalorder %v156, 1
    %v158 = vsel %vm157, %v148, %v152
    %v159 = vsel %vm157, %v150, %v154
    %v160 = vsel %vm157, %v152, %v148
    %v161 = vsel %vm157, %v154, %v150
    %162 = vrot.lane.b32.xlu0 %v130, 127
    %v163 = vpop.permute.xlu0 %162
    %164 = vrot.lane.b32.xlu0 %v136, 127
    %v165 = vpop.permute.xlu0 %164
    %166 = vrot.lane.b32.xlu0 %v132, 127
    %v167 = vpop.permute.xlu0 %166
    %168 = vrot.lane.b32.xlu0 %v138, 127
    %v169 = vpop.permute.xlu0 %168
    %vm170 = vcmp.lt.s32.totalorder %v156, 127
    %v171 = vsel %vm170, %v163, %v167
    %v172 = vsel %vm170, %v165, %v169
    %v173 = vsel %vm170, %v167, %v163
    %v174 = vsel %vm170, %v169, %v165
    %v176 = vlaneseq
    %v177 = vshrl.u32 %v176, 7
    %v178 = vsub.s32 0, %v177
    %v179 = vrot.slane %v140, %v178
    %v180 = vlaneseq
    %v181 = vshrl.u32 %v180, 7
    %v182 = vsub.s32 1, %v181
    %v183 = vrot.slane %v140, %v182
    %v186 = vmul.f32 %v160, %v179
    %v187 = vmul.f32 %v158, %v183
    %v188 = vmul.f32 %v161, %v179
    %v189 = vmul.f32 %v159, %v183
    %v190 = vadd.f32 %v130, %v186
    %v191 = vadd.f32 %v132, %v187
    %v192 = vadd.f32 %v136, %v188
    %v193 = vadd.f32 %v138, %v189
    %v195 = vlaneseq
    %v196 = vshrl.u32 %v195, 7
    %v197 = vsub.s32 0, %v196
    %v198 = vrot.slane %v142, %v197
    %v199 = vlaneseq
    %v200 = vshrl.u32 %v199, 7
    %v201 = vsub.s32 1, %v200
    %v202 = vrot.slane %v142, %v201
    %v205 = vmul.f32 %v171, %v198
    %v206 = vmul.f32 %v173, %v202
    %v207 = vmul.f32 %v172, %v198
    %v208 = vmul.f32 %v174, %v202
    %v209 = vadd.f32 %v190, %v205
    %v210 = vadd.f32 %v191, %v206
    %v211 = vadd.f32 %v192, %v207
    %v212 = vadd.f32 %v193, %v208
    %213 = vrot.lane.b32.xlu0 %v209, 16
    %v214 = vpop.permute.xlu0 %213
    %215 = vrot.lane.b32.xlu0 %v211, 16
    %v216 = vpop.permute.xlu0 %215
    %217 = vrot.lane.b32.xlu0 %v210, 16
    %v218 = vpop.permute.xlu0 %217
    %219 = vrot.lane.b32.xlu0 %v212, 16
    %v220 = vpop.permute.xlu0 %219
    %vm221 = vcmp.lt.s32.totalorder %v156, 16
    %v222 = vsel %vm221, %v214, %v218
    %v223 = vsel %vm221, %v216, %v220
    %v224 = vsel %vm221, %v218, %v214
    %v225 = vsel %vm221, %v220, %v216
    %226 = vrot.lane.b32.xlu0 %v209, 112
    %v227 = vpop.permute.xlu0 %226
    %228 = vrot.lane.b32.xlu0 %v211, 112
    %v229 = vpop.permute.xlu0 %228
    %230 = vrot.lane.b32.xlu0 %v210, 112
    %v231 = vpop.permute.xlu0 %230
    %232 = vrot.lane.b32.xlu0 %v212, 112
    %v233 = vpop.permute.xlu0 %232
    %vm234 = vcmp.lt.s32.totalorder %v156, 112
    %v235 = vsel %vm234, %v227, %v231
    %v236 = vsel %vm234, %v229, %v233
    %v237 = vsel %vm234, %v231, %v227
    %v238 = vsel %vm234, %v233, %v229
    %v240 = vlaneseq
    %v241 = vshrl.u32 %v240, 7
    %v242 = vsub.s32 0, %v241
    %v243 = vrot.slane %v144, %v242
    %v244 = vlaneseq
    %v245 = vshrl.u32 %v244, 7
    %v246 = vsub.s32 1, %v245
    %v247 = vrot.slane %v144, %v246
    %v250 = vmul.f32 %v224, %v243
    %v251 = vmul.f32 %v222, %v247
    %v252 = vmul.f32 %v225, %v243
    %v253 = vmul.f32 %v223, %v247
    %v254 = vadd.f32 %v209, %v250
    %v255 = vadd.f32 %v210, %v251
    %v256 = vadd.f32 %v211, %v252
    %v257 = vadd.f32 %v212, %v253
    %v259 = vlaneseq
    %v260 = vshrl.u32 %v259, 7
    %v261 = vsub.s32 0, %v260
    %v262 = vrot.slane %v146, %v261
    %v263 = vlaneseq
    %v264 = vshrl.u32 %v263, 7
    %v265 = vsub.s32 1, %v264
    %v266 = vrot.slane %v146, %v265
    %v269 = vmul.f32 %v235, %v262
    %v270 = vmul.f32 %v237, %v266
    %v271 = vmul.f32 %v236, %v262
    %v272 = vmul.f32 %v238, %v266
    %v273 = vadd.f32 %v254, %v269
    %v274 = vadd.f32 %v255, %v270
    %v275 = vadd.f32 %v256, %v271
    %v276 = vadd.f32 %v257, %v272
    %v277 = vld [vmem:[#allocation2] sm:$0xf]
    %v278 = vld [vmem:[#allocation2 + $0x4] sm:$0xf]
    %v279 = vld [vmem:[#allocation2 + $0x8] sm:$0xf]
    %v280 = vld [vmem:[#allocation2 + $0xc] sm:$0xf]
    %v281 = vld [vmem:[#allocation2 + $0x10] sm:$0xf]
    %v282 = vld [vmem:[#allocation2 + $0x14] sm:$0xf]
    %v283 = vld [vmem:[#allocation2 + $0x18] sm:$0xf]
    %v284 = vld [vmem:[#allocation2 + $0x1c] sm:$0xf]
    %v285 = vld [vmem:[#allocation2 + $0x20] sm:$0xf]
    %v286 = vld [vmem:[#allocation2 + $0x24] sm:$0xf]
    %v287 = vld [vmem:[#allocation2 + $0x28] sm:$0xf]
    %v288 = vld [vmem:[#allocation2 + $0x2c] sm:$0xf]
    %v289 = vld [vmem:[#allocation2 + $0x30] sm:$0xf]
    %v290 = vld [vmem:[#allocation2 + $0x34] sm:$0xf]
    %v291 = vld [vmem:[#allocation2 + $0x38] sm:$0xf]
    %v292 = vld [vmem:[#allocation2 + $0x3c] sm:$0xf]
    %v293 = vld [vmem:[#allocation2 + $0x40] sm:$0xf]
    %v294 = vld [vmem:[#allocation2 + $0x44] sm:$0xf]
    %v295 = vld [vmem:[#allocation2 + $0x48] sm:$0xf]
    %v296 = vld [vmem:[#allocation2 + $0x4c] sm:$0xf]
    %v297 = vld [vmem:[#allocation2 + $0x50] sm:$0xf]
    %v298 = vld [vmem:[#allocation2 + $0x54] sm:$0xf]
    %v299 = vld [vmem:[#allocation2 + $0x58] sm:$0xf]
    %v300 = vld [vmem:[#allocation2 + $0x5c] sm:$0xf]
    %v301 = vld [vmem:[#allocation2 + $0x60] sm:$0xf]
    %v302 = vld [vmem:[#allocation2 + $0x64] sm:$0xf]
    %v303 = vld [vmem:[#allocation2 + $0x68] sm:$0xf]
    %v304 = vld [vmem:[#allocation2 + $0x6c] sm:$0xf]
    %v305 = vld [vmem:[#allocation2 + $0x70] sm:$0xf]
    %v306 = vld [vmem:[#allocation2 + $0x74] sm:$0xf]
    %v307 = vld [vmem:[#allocation2 + $0x78] sm:$0xf]
    %v308 = vld [vmem:[#allocation2 + $0x7c] sm:$0xf]
    %v309 = vunpack.c.l.bf16 %v277
    %v310 = vunpack.c.l.bf16 %v278
    %v311 = vunpack.c.l.bf16 %v279
    %v312 = vunpack.c.l.bf16 %v280
    %v313 = vunpack.c.l.bf16 %v281
    %v314 = vunpack.c.l.bf16 %v282
    %v315 = vunpack.c.l.bf16 %v283
    %v316 = vunpack.c.l.bf16 %v284
    %v317 = vunpack.c.l.bf16 %v285
    %v318 = vunpack.c.l.bf16 %v286
    %v319 = vunpack.c.l.bf16 %v287
    %v320 = vunpack.c.l.bf16 %v288
    %v321 = vunpack.c.l.bf16 %v289
    %v322 = vunpack.c.l.bf16 %v290
    %v323 = vunpack.c.l.bf16 %v291
    %v324 = vunpack.c.l.bf16 %v292
    %v325 = vunpack.c.l.bf16 %v293
    %v326 = vunpack.c.l.bf16 %v294
    %v327 = vunpack.c.l.bf16 %v295
    %v328 = vunpack.c.l.bf16 %v296
    %v329 = vunpack.c.l.bf16 %v297
    %v330 = vunpack.c.l.bf16 %v298
    %v331 = vunpack.c.l.bf16 %v299
    %v332 = vunpack.c.l.bf16 %v300
    %v333 = vunpack.c.l.bf16 %v301
    %v334 = vunpack.c.l.bf16 %v302
    %v335 = vunpack.c.l.bf16 %v303
    %v336 = vunpack.c.l.bf16 %v304
    %v337 = vunpack.c.l.bf16 %v305
    %v338 = vunpack.c.l.bf16 %v306
    %v339 = vunpack.c.l.bf16 %v307
    %v340 = vunpack.c.l.bf16 %v308
    %341 = vmatprep.subr.mxu0 0.0
    %342 = vmatpush1.msra.mxu0 %v309
    %343 = vmatprep.subr.mxu0 0.0
    %344 = vmatpush1.msra.mxu0 %v310
    %345 = vmatprep.subr.mxu0 0.0
    %346 = vmatpush1.msra.mxu0 %v311
    %347 = vmatprep.subr.mxu0 0.0
    %348 = vmatpush1.msra.mxu0 %v312
    %349 = vmatprep.subr.mxu0 0.0
    %350 = vmatpush1.msra.mxu0 %v313
    %351 = vmatprep.subr.mxu0 0.0
    %352 = vmatpush1.msra.mxu0 %v314
    %353 = vmatprep.subr.mxu0 0.0
    %354 = vmatpush1.msra.mxu0 %v315
    %355 = vmatprep.subr.mxu0 0.0
    %356 = vmatpush1.msra.mxu0 %v316
    %357 = vmatprep.subr.mxu0 0.0
    %358 = vmatpush1.msra.mxu0 %v317
    %359 = vmatprep.subr.mxu0 0.0
    %360 = vmatpush1.msra.mxu0 %v318
    %361 = vmatprep.subr.mxu0 0.0
    %362 = vmatpush1.msra.mxu0 %v319
    %363 = vmatprep.subr.mxu0 0.0
    %364 = vmatpush1.msra.mxu0 %v320
    %365 = vmatprep.subr.mxu0 0.0
    %366 = vmatpush1.msra.mxu0 %v321
    %367 = vmatprep.subr.mxu0 0.0
    %368 = vmatpush1.msra.mxu0 %v322
    %369 = vmatprep.subr.mxu0 0.0
    %370 = vmatpush1.msra.mxu0 %v323
    %371 = vmatprep.subr.mxu0 0.0
    %372 = vmatpush1.msra.mxu0 %v324
    %373 = vmatprep.subr.mxu0 0.0
    %374 = vmatpush1.msra.mxu0 %v325
    %375 = vmatprep.subr.mxu0 0.0
    %376 = vmatpush1.msra.mxu0 %v326
    %377 = vmatprep.subr.mxu0 0.0
    %378 = vmatpush1.msra.mxu0 %v327
    %379 = vmatprep.subr.mxu0 0.0
    %380 = vmatpush1.msra.mxu0 %v328
    %381 = vmatprep.subr.mxu0 0.0
    %382 = vmatpush1.msra.mxu0 %v329
    %383 = vmatprep.subr.mxu0 0.0
    %384 = vmatpush1.msra.mxu0 %v330
    %385 = vmatprep.subr.mxu0 0.0
    %386 = vmatpush1.msra.mxu0 %v331
    %387 = vmatprep.subr.mxu0 0.0
    %388 = vmatpush1.msra.mxu0 %v332
    %389 = vmatprep.subr.mxu0 0.0
    %390 = vmatpush1.msra.mxu0 %v333
    %391 = vmatprep.subr.mxu0 0.0
    %392 = vmatpush1.msra.mxu0 %v334
    %393 = vmatprep.subr.mxu0 0.0
    %394 = vmatpush1.msra.mxu0 %v335
    %395 = vmatprep.subr.mxu0 0.0
    %396 = vmatpush1.msra.mxu0 %v336
    %397 = vmatprep.subr.mxu0 0.0
    %398 = vmatpush1.msra.mxu0 %v337
    %399 = vmatprep.subr.mxu0 0.0
    %400 = vmatpush1.msra.mxu0 %v338
    %401 = vmatprep.subr.mxu0 0.0
    %402 = vmatpush1.msra.mxu0 %v339
    %403 = vmatprep.subr.mxu0 0.0
    %404 = vmatpush1.msra.mxu0 %v340
    %405 = vmatprep.mubr.f32.mxu0 %v274
    %406 = vmatmul.mubr.f32.gmra.mrb[0].mxu0 %v273
    %v407 = vpop.f32.mrb[0].mxu0
    %v408 = vadd.f32 0.0, %v407
    %v409 = vpop.f32.mrb[0].mxu0
    %410 = vmatprep.mubr.f32.mxu0 %v276
    %411 = vmatmul.mubr.f32.gmra.mrb[0].mxu0 %v275
    %v412 = vpop.f32.mrb[0].mxu0
    %v413 = vadd.f32 0.0, %v412
    %v414 = vpop.f32.mrb[0].mxu0
    %415 = vdwg.mxu0
    %v416 = vld [vmem:[%s5] sm:$0x1]
    %v418 = vlaneseq
    %v419 = vshrl.u32 %v418, 7
    %v420 = vsub.s32 0, %v419
    %v421 = vrot.slane %v416, %v420
    %v423 = vmul.f32 %v408, %v421
    %v424 = vmul.f32 %v413, %v421
    %425 = vst [vmem:[#allocation5] sm:$0xff] %v423
    %426 = vst [vmem:[#allocation5 + $0x8] sm:$0xff] %v424
    // Predicated region
    $region30: #{tpu_custom_call.1} parent=1 // pred_check
      _
    $region31: #{tpu_custom_call.1} parent=1 // pred_check_branch
      %428 = sbr.rel (0) target = $region33
    $region32: #{tpu_custom_call.1} parent=1 // pred_region
      %s430 = ssub.s32 256, 256
      %431 = vsyncadd [#allocation4], %s430
      %s432 = sshll.u32 [#allocation5], 4
      %s433 = int_to_ptr.vmem [resolvable:$true] %s432
      %438 = dma.vmem_to_hbm [thread:$0]  %s433, 256, %s6, [#allocation4], 128, 128, 8
    $region33: #{tpu_custom_call.1} parent=1 // pred_fallthru
      _
    // Predicated region
    $region34: #{tpu_custom_call.1} parent=1 // pred_check
      _
    $region35: #{tpu_custom_call.1} parent=1 // pred_check_branch
      %440 = sbr.rel (0) target = $region37
    $region36: #{tpu_custom_call.1} parent=1 // pred_region
      %441 = dma.done [#allocation4], 256
    $region37: #{tpu_custom_call.1} parent=1 // pred_fallthru
      _
    %442 = vsyncpa [#allocation3], 1
    %443 = vsyncpa [#allocation4], 1

</llo_original>
